<compile_context>
chip_gen: v7x
topology: tpu7x:2x2x1
jax: 0.10.0
libtpu: 0.0.40
codegen_flags: <defaults>
</compile_context>

<pallas_src>
import jax
import jax.numpy as jnp
from jax.experimental import pallas as pl
from jax.experimental.pallas import tpu as pltpu

_BLOCK_BYTES = 4 * 1024 * 1024   # ~4 MiB per array per grid step
_MIN_ROWS = 8                    # sublane granularity for block_rows


def _softplus_f32(x):
    # BCEWithLogits(x, target=0), reduction='none'  ->  softplus(x).
    # log(1 + z) instead of log1p(z): guarantees 2 EUP ops/element (exp + log).
    # When z underflows in the 1+z sum, max(x,0) dominates the result, so the
    # answer is unchanged at the 1e-5 tolerance of the f32 reference.
    z = jnp.exp(-jnp.abs(x))
    return jnp.maximum(x, 0.0) + jnp.log(1.0 + z)


def _acloss_kernel(x_ref, o_ref):
    # Internal math in f32 (v5e has no bf16 VPU/EUP; matches PyTorch f32 ref);
    # I/O stays in the caller's dtype so HBM traffic is not inflated.
    x = x_ref[...].astype(jnp.float32)
    o_ref[...] = _softplus_f32(x).astype(o_ref.dtype)


def _run_2d(x2d: jax.Array, dtype, n_elems: int) -> jax.Array:
    rows, lanes = x2d.shape
    itemsize = jnp.dtype(dtype).itemsize

    # ~4 MiB of I/O dtype per block (1024 rows f32 / 2048 rows bf16 at lanes=1024).
    budget_rows = max(_MIN_ROWS, _BLOCK_BYTES // (lanes * itemsize))

    if rows <= 2 * _MIN_ROWS:
        # Tiny input: one full-array block (one DMA in, one vreg pass, one DMA out).
        block_rows = rows
    else:
        # At least two grid steps so the "parallel" axis can shard across the
        # two v7x TensorCores; cap at the ~4 MiB byte budget.  block_rows is a
        # multiple of 8, ragged last block is handled by the pipeline.
        half = -(-rows // 2)                        # cdiv(rows, 2)
        half = -(-half // _MIN_ROWS) * _MIN_ROWS    # round up to multiple of 8
        block_rows = min(budget_rows, half)
    grid = (pl.cdiv(rows, block_rows),)

    cost = pl.CostEstimate(
        flops=3 * n_elems,                       # max / abs / add (nominal)
        transcendentals=2 * n_elems,             # exp + log per element
        bytes_accessed=2 * n_elems * itemsize,   # read + write in the I/O dtype
    )

    return pl.pallas_call(
        _acloss_kernel,
        out_shape=jax.ShapeDtypeStruct((rows, lanes), dtype),
        grid_spec=pltpu.PrefetchScalarGridSpec(
            num_scalar_prefetch=0,
            grid=grid,
            in_specs=[pl.BlockSpec((block_rows, lanes), lambda i: (i, 0))],
            out_specs=pl.BlockSpec((block_rows, lanes), lambda i: (i, 0)),
        ),
        compiler_params=pltpu.CompilerParams(
            dimension_semantics=("parallel",),
            # 4 MiB blocks x 2 arrays x 2 pipeline buffers = 16 MiB, which is
            # exactly v5e's default scoped-VMEM limit; raise it explicitly
            # (safe on all generations: 128/128/64 MiB physical).
            vmem_limit_bytes=32 * 1024 * 1024,
        ),
        cost_estimate=cost,
    )(x2d)


def ac_loss(logit: jax.Array) -> jax.Array:
    """Pallas TPU implementation of ACLoss (reduction='none')."""
    orig_shape = logit.shape
    dtype = logit.dtype

    flat = logit.reshape(-1)
    n = flat.shape[0]
    if n == 0:
        return logit

    # Widest lane count dividing n -> no padding pass for aligned shapes.
    lanes = None
    for cand in (1024, 512, 256, 128):
        if n % cand == 0:
            lanes = cand
            break

    if lanes is not None:
        out2d = _run_2d(flat.reshape(n // lanes, lanes), dtype, n)
        return out2d.reshape(orig_shape)

    # n not a multiple of 128: kernel on the aligned prefix, plain jnp on the
    # (<128-element) tail.  Avoids the old full-tensor pad + slice HBM passes.
    n_main = (n // 128) * 128
    pieces = []
    if n_main:
        main2d = _run_2d(flat[:n_main].reshape(n_main // 128, 128), dtype, n_main)
        pieces.append(main2d.reshape(-1))
    tail = flat[n_main:]
    pieces.append(_softplus_f32(tail.astype(jnp.float32)).astype(dtype))
    out = jnp.concatenate(pieces) if len(pieces) > 1 else pieces[0]
    return out.reshape(orig_shape)


def _ac_loss_ref(logit: jax.Array) -> jax.Array:
    """Pure-JAX reference: BCE-with-logits vs. zero target, reduction='none'."""
    x = logit.astype(jnp.float32)
    ref = jnp.maximum(x, 0.0) + jnp.log1p(jnp.exp(-jnp.abs(x)))
    return ref.astype(logit.dtype)


if __name__ == "__main__":
    key = jax.random.PRNGKey(0)
    # Small NCHW logit tensor, consistent with a segmentation-style head.
    x = jax.random.normal(key, (2, 4, 16, 16), dtype=jnp.float32) * 3.0

    out = jax.block_until_ready(ac_loss(x))
    ref = _ac_loss_ref(x)

    assert out.shape == x.shape
    assert out.dtype == x.dtype
    assert jnp.allclose(out, ref, atol=1e-5, rtol=1e-5)
    print("KERNEL_OK")
</pallas_src>

<mosaic_0001>
module attributes {stable_mosaic.version = 11 : i64} {
  func.func @_acloss_kernel(%arg0: i32, %arg1: memref<2x1024xf32, #tpu.memory_space<vmem>>, %arg2: memref<2x1024xf32, #tpu.memory_space<vmem>>) attributes {dimension_semantics = [#tpu.dimension_semantics<parallel>], iteration_bounds = array<i64: 1>, scalar_prefetch = 0 : i64, scratch_operands = 0 : i64, tpu.core_type = #tpu.core_type<tc>, window_params = [{transform_indices = @transform_0, window_bounds = array<i64: 2, 1024>}, {transform_indices = @transform_1, window_bounds = array<i64: 2, 1024>}]} {
    %c0 = arith.constant 0 : index
    %c0_0 = arith.constant 0 : index
    %0 = vector.load %arg1[%c0, %c0_0] : memref<2x1024xf32, #tpu.memory_space<vmem>>, vector<2x1024xf32>
    %1 = math.absf %0 : vector<2x1024xf32>
    %cst = arith.constant 0.000000e+00 : f32
    %2 = vector.broadcast %cst : f32 to vector<2x1024xf32>
    %3 = arith.subf %2, %1 : vector<2x1024xf32>
    %4 = math.exp %3 : vector<2x1024xf32>
    %cst_1 = arith.constant 0.000000e+00 : f32
    %5 = vector.broadcast %cst_1 : f32 to vector<2x1024xf32>
    %6 = arith.maximumf %0, %5 : vector<2x1024xf32>
    %cst_2 = arith.constant 1.000000e+00 : f32
    %7 = vector.broadcast %cst_2 : f32 to vector<2x1024xf32>
    %8 = arith.addf %7, %4 : vector<2x1024xf32>
    %9 = math.log %8 : vector<2x1024xf32>
    %10 = arith.addf %6, %9 : vector<2x1024xf32>
    %c0_3 = arith.constant 0 : index
    %c0_4 = arith.constant 0 : index
    %11 = vector.load %arg2[%c0_3, %c0_4] : memref<2x1024xf32, #tpu.memory_space<vmem>>, vector<2x1024xf32>
    tpu.vector_store %arg2[%c0_3, %c0_4], %10 {strides = array<i32>} : memref<2x1024xf32, #tpu.memory_space<vmem>>, vector<2x1024xf32>,
    return
  }
  func.func @transform_0(%arg0: i32) -> (i32, i32) {
    %c0_i32 = arith.constant 0 : i32
    %c0_i32_0 = arith.constant 0 : i32
    return %arg0, %c0_i32 : i32, i32
  }
  func.func @transform_1(%arg0: i32) -> (i32, i32) {
    %c0_i32 = arith.constant 0 : i32
    %c0_i32_0 = arith.constant 0 : i32
    return %arg0, %c0_i32 : i32, i32
  }
}

</mosaic_0001>

<llo_original>
// kernel: tpu_custom_call.1
$region0: #{tpu_custom_call.1}
  #allocation0 [shape = 'u32[]', space=smem, size = 0x4, offset = 0x4, fixed_abs, tag = 'smem constant byte address 0x4 - core index']
  #allocation1 [shape = 'u32[144,128]{1,0:T(1,128)}', space=vmem, size = 0x12000, scoped, tag = 'internal scratch']
  %s0 = inlined_call_operand.hbm [shape: f32[2,1024], index: 0, kind: input, shape index: {}]
  %s1 = inlined_call_operand.hbm [shape: f32[2,1024], index: 1, kind: output, shape index: {}]
  %s2 = sld [smem:[#allocation0]]
  $region18: #{tpu_custom_call.1} parent=0
    _
  %s4 = ssub.s32 1, %s2
  %s5 = scalar_select 0, %s4, %s2
  $region1: #{tpu_custom_call.1} parent=0
    #allocation2 [shape = 'u8[8192]{0}', space=vmem, size = 0x2000, scoped, tag = 'input window, operand 0, single buffered']
    #allocation3 [shape = 's32[1]{0}', space=sflag, size = 0x4, scoped, tag = 'scoped memory for tpu_custom_call.1']
    #allocation4 [shape = 's32[1]{0}', space=sflag, size = 0x4, scoped, tag = 'scoped memory for tpu_custom_call.1']
    #allocation5 [shape = 'u8[8192]{0}', space=vmem, size = 0x2000, scoped, tag = 'output window, operand 0, single buffered']
    %6 = vsyncpa [#allocation3], 0
    %7 = vsyncpa [#allocation4], 0
    // Predicated region
    $region2: #{tpu_custom_call.1} parent=1 // pred_check
      _
    $region3: #{tpu_custom_call.1} parent=1 // pred_check_branch
      %9 = sbr.rel (0) target = $region5
    $region4: #{tpu_custom_call.1} parent=1 // pred_region
      %s11 = ssub.s32 256, 256
      %12 = vsyncadd [#allocation3], %s11
      %s14 = sshll.u32 [#allocation2], 4
      %s15 = int_to_ptr.vmem [resolvable:$true] %s14
      %17 = dma.hbm_to_vmem [thread:$0]  %s0, 256, %s15, [#allocation3]
    $region5: #{tpu_custom_call.1} parent=1 // pred_fallthru
      _
    // Predicated region
    $region6: #{tpu_custom_call.1} parent=1 // pred_check
      _
    $region7: #{tpu_custom_call.1} parent=1 // pred_check_branch
      %19 = sbr.rel (0) target = $region9
    $region8: #{tpu_custom_call.1} parent=1 // pred_region
      %20 = dma.done [#allocation3], 256
    $region9: #{tpu_custom_call.1} parent=1 // pred_fallthru
      _
    %v21 = vld [vmem:[#allocation2] sm:$0xff]
    %v22 = vld [vmem:[#allocation2 + $0x8] sm:$0xff]
    %v23 = vand.u32 2147483647, %v21
    %v24 = vand.u32 2147483647, %v22
    %v25 = vsub.f32 0.0, %v23
    %v26 = vsub.f32 0.0, %v24
    %v27 = vmul.f32 %v25, 1.442695
    %v28 = vpow.pop %v27
    %v29 = vmul.f32 %v26, 1.442695
    %v30 = vpow.pop %v29
    %v31 = vmax.f32 %v21, 0.0
    %v32 = vmax.f32 %v22, 0.0
    %v33 = vadd.f32 %v28, 1.0
    %v34 = vadd.f32 %v30, 1.0
    %v35 = vlog2.pop %v33
    %v36 = vmul.f32 %v35, 0.6931472
    %v37 = vlog2.pop %v34
    %v38 = vmul.f32 %v37, 0.6931472
    %v39 = vadd.f32 %v31, %v36
    %v40 = vadd.f32 %v32, %v38
    %41 = vst [vmem:[#allocation5] sm:$0xff] %v39
    %42 = vst [vmem:[#allocation5 + $0x8] sm:$0xff] %v40
    // Predicated region
    $region10: #{tpu_custom_call.1} parent=1 // pred_check
      _
    $region11: #{tpu_custom_call.1} parent=1 // pred_check_branch
      %44 = sbr.rel (0) target = $region13
    $region12: #{tpu_custom_call.1} parent=1 // pred_region
      %s46 = ssub.s32 256, 256
      %47 = vsyncadd [#allocation4], %s46
      %s49 = sshll.u32 [#allocation5], 4
      %s50 = int_to_ptr.vmem [resolvable:$true] %s49
      %52 = dma.vmem_to_hbm [thread:$0]  %s50, 256, %s1, [#allocation4]
    $region13: #{tpu_custom_call.1} parent=1 // pred_fallthru
      _
    // Predicated region
    $region14: #{tpu_custom_call.1} parent=1 // pred_check
      _
    $region15: #{tpu_custom_call.1} parent=1 // pred_check_branch
      %54 = sbr.rel (0) target = $region17
    $region16: #{tpu_custom_call.1} parent=1 // pred_region
      %55 = dma.done [#allocation4], 256
    $region17: #{tpu_custom_call.1} parent=1 // pred_fallthru
      _
    %56 = vsyncpa [#allocation3], 1
    %57 = vsyncpa [#allocation4], 1

</llo_original>
